<compile_context>
chip_gen: v7x
topology: tpu7x:2x2x1
jax: 0.10.0
libtpu: 0.0.40
codegen_flags: <defaults>
</compile_context>

<pallas_src>
import functools

import jax
import jax.numpy as jnp
from jax.experimental import pallas as pl
from jax.experimental.pallas import tpu as pltpu


# ---------------------------------------------------------------------------
# Pallas kernel: one batch element (graph) per grid step.
# ---------------------------------------------------------------------------
def _gat_kernel(h_ref, adj_ref, w_ref, a_src_ref, a_dst_ref, out_ref, *,
                alpha: float, concat: bool):
    h = h_ref[...]            # (N, F_in)
    adj = adj_ref[...]        # (N, N)
    W = w_ref[...]            # (F_in, F_out)
    a_src = a_src_ref[...]    # (1, F_out)
    a_dst = a_dst_ref[...]    # (1, F_out)

    # Linear projection (MXU).
    Wh = jnp.dot(h, W, preferred_element_type=jnp.float32)          # (N, F_out)

    # Attention logits: e[i, j] = a_src . Wh[i] + a_dst . Wh[j]
    # Both contractions are on the last dims so the results land directly in
    # (N, 1) and (1, N) layouts (no transpose needed).
    f_src = jax.lax.dot_general(
        Wh, a_src, (((1,), (1,)), ((), ())),
        preferred_element_type=jnp.float32)                         # (N, 1)
    f_dst = jax.lax.dot_general(
        a_dst, Wh, (((1,), (1,)), ((), ())),
        preferred_element_type=jnp.float32)                         # (1, N)
    e = f_src + f_dst                                               # (N, N)

    # LeakyReLU(alpha)
    e = jnp.where(e > 0, e, alpha * e)

    # Mask non-edges exactly like the PyTorch code (-9e15), softmax over j.
    e = jnp.where(adj > 0, e, jnp.float32(-9.0e15))
    m = jnp.max(e, axis=-1, keepdims=True)
    p = jnp.exp(e - m)
    denom = jnp.sum(p, axis=-1, keepdims=True)
    attn = p * pl.reciprocal(denom)                                 # (N, N)

    # Aggregate neighbor features (MXU).
    h_prime = jnp.dot(attn, Wh, preferred_element_type=jnp.float32)  # (N, F_out)

    if concat:
        # ELU (alpha=1.0), clamped exp arg to avoid overflow in untaken branch.
        h_prime = jnp.where(
            h_prime > 0, h_prime,
            jnp.exp(jnp.minimum(h_prime, 0.0)) - 1.0)

    out_ref[...] = h_prime.astype(out_ref.dtype)


# ---------------------------------------------------------------------------
# Wrapper
# ---------------------------------------------------------------------------
def gat_layer_forward(h, adj, W, a, *, alpha: float = 0.2, concat: bool = True):
    """GAT layer forward.

    h:   (B, N, F_in)  float32 node features
    adj: (B, N, N)     float32 adjacency (edge iff > 0)
    W:   (F_in, F_out) float32
    a:   (2*F_out, 1)  float32 attention vector
    returns (B, N, F_out)
    """
    B, N, F_in = h.shape
    F_in_w, F_out = W.shape
    assert F_in == F_in_w and a.shape == (2 * F_out, 1)
    assert adj.shape == (B, N, N)

    # Split the attention vector into source / destination halves (tiny,
    # one-time layout plumbing; avoids building the (B,N,N,2F) pair tensor).
    a_src = a[:F_out, 0].reshape(1, F_out)
    a_dst = a[F_out:, 0].reshape(1, F_out)

    kernel = functools.partial(_gat_kernel, alpha=float(alpha),
                               concat=bool(concat))

    return pl.pallas_call(
        kernel,
        out_shape=jax.ShapeDtypeStruct((B, N, F_out), h.dtype),
        grid_spec=pltpu.PrefetchScalarGridSpec(
            num_scalar_prefetch=0,
            grid=(B,),
            in_specs=[
                pl.BlockSpec((None, N, F_in), lambda b: (b, 0, 0)),   # h
                pl.BlockSpec((None, N, N), lambda b: (b, 0, 0)),      # adj
                pl.BlockSpec((F_in, F_out), lambda b: (0, 0)),        # W (resident)
                pl.BlockSpec((1, F_out), lambda b: (0, 0)),           # a_src
                pl.BlockSpec((1, F_out), lambda b: (0, 0)),           # a_dst
            ],
            out_specs=pl.BlockSpec((None, N, F_out), lambda b: (b, 0, 0)),
        ),
        compiler_params=pltpu.CompilerParams(
            dimension_semantics=("parallel",),   # batches are independent
        ),
    )(h, adj, W, a_src, a_dst)


# ---------------------------------------------------------------------------
if __name__ == "__main__":
    # Lane/sublane-friendly small shapes: N multiple of 128, F multiples of 8.
    B, N, F_in, F_out = 2, 128, 32, 64
    alpha = 0.2

    key = jax.random.PRNGKey(0)
    k1, k2, k3, k4 = jax.random.split(key, 4)

    h = jax.random.normal(k1, (B, N, F_in), dtype=jnp.float32)
    W = jax.random.normal(k2, (F_in, F_out), dtype=jnp.float32) * 0.35
    a = jax.random.normal(k3, (2 * F_out, 1), dtype=jnp.float32) * 0.1
    adj = (jax.random.uniform(k4, (B, N, N)) > 0.5).astype(jnp.float32)
    # self-loops so no node is fully masked (standard GAT usage)
    adj = jnp.maximum(adj, jnp.eye(N, dtype=jnp.float32)[None])

    out = gat_layer_forward(h, adj, W, a, alpha=alpha, concat=True)
    jax.block_until_ready(out)
    assert out.shape == (B, N, F_out)

    # Pure-JAX reference matching the PyTorch forward exactly.
    Wh = jnp.einsum("bnf,fo->bno", h, W)
    f_src = Wh @ a[:F_out, 0]                      # (B, N)
    f_dst = Wh @ a[F_out:, 0]                      # (B, N)
    e = f_src[:, :, None] + f_dst[:, None, :]      # (B, N, N)
    e = jnp.where(e > 0, e, alpha * e)             # leaky_relu
    e = jnp.where(adj > 0, e, jnp.float32(-9.0e15))
    attn = jax.nn.softmax(e, axis=-1)
    ref = jnp.einsum("bij,bjo->bio", attn, Wh)
    ref = jnp.where(ref > 0, ref, jnp.exp(jnp.minimum(ref, 0.0)) - 1.0)  # elu

    max_err = jnp.max(jnp.abs(out - ref))
    assert jnp.allclose(out, ref, atol=1e-4, rtol=1e-4), f"max abs diff = {max_err}"

    print("KERNEL_OK")
</pallas_src>

<mosaic_0001>
module attributes {stable_mosaic.version = 11 : i64} {
  func.func @_gat_kernel(%arg0: i32, %arg1: memref<1x128x32xf32, #tpu.memory_space<vmem>>, %arg2: memref<1x128x128xf32, #tpu.memory_space<vmem>>, %arg3: memref<32x64xf32, #tpu.memory_space<vmem>>, %arg4: memref<1x64xf32, #tpu.memory_space<vmem>>, %arg5: memref<1x64xf32, #tpu.memory_space<vmem>>, %arg6: memref<1x128x64xf32, #tpu.memory_space<vmem>>) attributes {dimension_semantics = [#tpu.dimension_semantics<parallel>], iteration_bounds = array<i64: 2>, scalar_prefetch = 0 : i64, scratch_operands = 0 : i64, tpu.core_type = #tpu.core_type<tc>, window_params = [{transform_indices = @transform_0, window_bounds = array<i64: 1, 128, 32>}, {transform_indices = @transform_1, window_bounds = array<i64: 1, 128, 128>}, {pipeline_mode = #tpu.pipeline_mode<synchronous>, transform_indices = @transform_2, window_bounds = array<i64: 32, 64>}, {pipeline_mode = #tpu.pipeline_mode<synchronous>, transform_indices = @transform_3, window_bounds = array<i64: 1, 64>}, {pipeline_mode = #tpu.pipeline_mode<synchronous>, transform_indices = @transform_4, window_bounds = array<i64: 1, 64>}, {transform_indices = @transform_5, window_bounds = array<i64: 1, 128, 64>}]} {
    %c0 = arith.constant 0 : index
    %c0_0 = arith.constant 0 : index
    %c0_1 = arith.constant 0 : index
    %0 = vector.load %arg1[%c0, %c0_0, %c0_1] : memref<1x128x32xf32, #tpu.memory_space<vmem>>, vector<1x128x32xf32>
    %1 = vector.shape_cast %0 : vector<1x128x32xf32> to vector<128x32xf32>
    %c0_2 = arith.constant 0 : index
    %c0_3 = arith.constant 0 : index
    %c0_4 = arith.constant 0 : index
    %2 = vector.load %arg2[%c0_2, %c0_3, %c0_4] : memref<1x128x128xf32, #tpu.memory_space<vmem>>, vector<1x128x128xf32>
    %3 = vector.shape_cast %2 : vector<1x128x128xf32> to vector<128x128xf32>
    %c0_5 = arith.constant 0 : index
    %c0_6 = arith.constant 0 : index
    %4 = vector.load %arg3[%c0_5, %c0_6] : memref<32x64xf32, #tpu.memory_space<vmem>>, vector<32x64xf32>
    %c0_7 = arith.constant 0 : index
    %c0_8 = arith.constant 0 : index
    %5 = vector.load %arg4[%c0_7, %c0_8] : memref<1x64xf32, #tpu.memory_space<vmem>>, vector<1x64xf32>
    %c0_9 = arith.constant 0 : index
    %c0_10 = arith.constant 0 : index
    %6 = vector.load %arg5[%c0_9, %c0_10] : memref<1x64xf32, #tpu.memory_space<vmem>>, vector<1x64xf32>
    %cst = arith.constant dense<0.000000e+00> : vector<128x64xf32>
    %7 = tpu.matmul %1, %4, %cst {dimension_numbers = #tpu.dot_dimension_numbers<[1], [0], [0], [1], [0, 0, 1, 1], [], []>} : vector<128x32xf32>, vector<32x64xf32>, vector<128x64xf32> -> vector<128x64xf32>
    %cst_11 = arith.constant dense<0.000000e+00> : vector<128x1xf32>
    %8 = tpu.matmul %7, %5, %cst_11 {dimension_numbers = #tpu.dot_dimension_numbers<[1], [1], [0], [0], [0, 0, 1, 0], [], []>} : vector<128x64xf32>, vector<1x64xf32>, vector<128x1xf32> -> vector<128x1xf32>
    %cst_12 = arith.constant dense<0.000000e+00> : vector<1x128xf32>
    %9 = tpu.matmul %6, %7, %cst_12 {dimension_numbers = #tpu.dot_dimension_numbers<[1], [1], [0], [0], [0, 0, 1, 0], [], []>} : vector<1x64xf32>, vector<128x64xf32>, vector<1x128xf32> -> vector<1x128xf32>
    %10 = vector.broadcast %8 : vector<128x1xf32> to vector<128x128xf32>
    %11 = vector.broadcast %9 : vector<1x128xf32> to vector<128x128xf32>
    %12 = arith.addf %10, %11 : vector<128x128xf32>
    %cst_13 = arith.constant 0.000000e+00 : f32
    %13 = vector.broadcast %cst_13 : f32 to vector<128x128xf32>
    %14 = arith.cmpf ogt, %12, %13 : vector<128x128xf32>
    %cst_14 = arith.constant 2.000000e-01 : f32
    %15 = vector.broadcast %cst_14 : f32 to vector<128x128xf32>
    %16 = arith.mulf %15, %12 : vector<128x128xf32>
    %17 = arith.select %14, %12, %16 : vector<128x128xi1>, vector<128x128xf32>
    %cst_15 = arith.constant 0.000000e+00 : f32
    %18 = vector.broadcast %cst_15 : f32 to vector<128x128xf32>
    %19 = arith.cmpf ogt, %3, %18 : vector<128x128xf32>
    %cst_16 = arith.constant -9.000000e+15 : f32
    %20 = vector.broadcast %cst_16 : f32 to vector<128x128xf32>
    %21 = arith.select %19, %17, %20 : vector<128x128xi1>, vector<128x128xf32>
    %cst_17 = arith.constant dense<0xFF800000> : vector<128xf32>
    %22 = vector.multi_reduction <maximumf>, %21, %cst_17 [1] : vector<128x128xf32> to vector<128xf32>
    %23 = vector.shape_cast %22 : vector<128xf32> to vector<128x1xf32>
    %24 = vector.broadcast %23 : vector<128x1xf32> to vector<128x128xf32>
    %25 = arith.subf %21, %24 : vector<128x128xf32>
    %26 = math.exp %25 : vector<128x128xf32>
    %cst_18 = arith.constant dense<0.000000e+00> : vector<128xf32>
    %27 = vector.multi_reduction <add>, %26, %cst_18 [1] : vector<128x128xf32> to vector<128xf32>
    %28 = vector.shape_cast %27 : vector<128xf32> to vector<128x1xf32>
    %29 = tpu.reciprocal %28 : vector<128x1xf32> -> vector<128x1xf32>
    %30 = vector.broadcast %29 : vector<128x1xf32> to vector<128x128xf32>
    %31 = arith.mulf %26, %30 : vector<128x128xf32>
    %cst_19 = arith.constant dense<0.000000e+00> : vector<128x64xf32>
    %32 = tpu.matmul %31, %7, %cst_19 {dimension_numbers = #tpu.dot_dimension_numbers<[1], [0], [0], [1], [0, 0, 1, 1], [], []>} : vector<128x128xf32>, vector<128x64xf32>, vector<128x64xf32> -> vector<128x64xf32>
    %cst_20 = arith.constant 0.000000e+00 : f32
    %33 = vector.broadcast %cst_20 : f32 to vector<128x64xf32>
    %34 = arith.cmpf ogt, %32, %33 : vector<128x64xf32>
    %cst_21 = arith.constant 0.000000e+00 : f32
    %35 = vector.broadcast %cst_21 : f32 to vector<128x64xf32>
    %36 = arith.minimumf %32, %35 : vector<128x64xf32>
    %37 = math.exp %36 : vector<128x64xf32>
    %cst_22 = arith.constant 1.000000e+00 : f32
    %38 = vector.broadcast %cst_22 : f32 to vector<128x64xf32>
    %39 = arith.subf %37, %38 : vector<128x64xf32>
    %40 = arith.select %34, %32, %39 : vector<128x64xi1>, vector<128x64xf32>
    %c0_23 = arith.constant 0 : index
    %c0_24 = arith.constant 0 : index
    %c0_25 = arith.constant 0 : index
    %41 = vector.load %arg6[%c0_23, %c0_24, %c0_25] : memref<1x128x64xf32, #tpu.memory_space<vmem>>, vector<1x128x64xf32>
    %42 = vector.shape_cast %41 : vector<1x128x64xf32> to vector<128x64xf32>
    %43 = vector.shape_cast %40 : vector<128x64xf32> to vector<1x128x64xf32>
    tpu.vector_store %arg6[%c0_23, %c0_24, %c0_25], %43 {strides = array<i32>} : memref<1x128x64xf32, #tpu.memory_space<vmem>>, vector<1x128x64xf32>,
    return
  }
  func.func @transform_0(%arg0: i32) -> (i32, i32, i32) {
    %c0_i32 = arith.constant 0 : i32
    %c0_i32_0 = arith.constant 0 : i32
    %c0_i32_1 = arith.constant 0 : i32
    return %arg0, %c0_i32, %c0_i32_0 : i32, i32, i32
  }
  func.func @transform_1(%arg0: i32) -> (i32, i32, i32) {
    %c0_i32 = arith.constant 0 : i32
    %c0_i32_0 = arith.constant 0 : i32
    %c0_i32_1 = arith.constant 0 : i32
    return %arg0, %c0_i32, %c0_i32_0 : i32, i32, i32
  }
  func.func @transform_2(%arg0: i32) -> (i32, i32) {
    %c0_i32 = arith.constant 0 : i32
    %c0_i32_0 = arith.constant 0 : i32
    %c0_i32_1 = arith.constant 0 : i32
    return %c0_i32, %c0_i32_0 : i32, i32
  }
  func.func @transform_3(%arg0: i32) -> (i32, i32) {
    %c0_i32 = arith.constant 0 : i32
    %c0_i32_0 = arith.constant 0 : i32
    %c0_i32_1 = arith.constant 0 : i32
    return %c0_i32, %c0_i32_0 : i32, i32
  }
  func.func @transform_4(%arg0: i32) -> (i32, i32) {
    %c0_i32 = arith.constant 0 : i32
    %c0_i32_0 = arith.constant 0 : i32
    %c0_i32_1 = arith.constant 0 : i32
    return %c0_i32, %c0_i32_0 : i32, i32
  }
  func.func @transform_5(%arg0: i32) -> (i32, i32, i32) {
    %c0_i32 = arith.constant 0 : i32
    %c0_i32_0 = arith.constant 0 : i32
    %c0_i32_1 = arith.constant 0 : i32
    return %arg0, %c0_i32, %c0_i32_0 : i32, i32, i32
  }
}

</mosaic_0001>

<llo_original>
// kernel: tpu_custom_call.1
$region0: #{tpu_custom_call.1}
  #allocation0 [shape = 'u32[]', space=smem, size = 0x4, offset = 0x4, fixed_abs, tag = 'smem constant byte address 0x4 - core index']
  #allocation1 [shape = 'u32[144,128]{1,0:T(1,128)}', space=vmem, size = 0x12000, scoped, tag = 'internal scratch']
  %s0 = inlined_call_operand.vmem [shape: f32[2,128,32], index: 0, kind: input, shape index: {}]
  %s1 = inlined_call_operand.vmem [shape: f32[2,128,128], index: 1, kind: input, shape index: {}]
  %s2 = inlined_call_operand.vmem [shape: f32[32,64], index: 2, kind: input, shape index: {}]
  %s3 = inlined_call_operand.vmem [shape: f32[1,64], index: 3, kind: input, shape index: {}]
  %s4 = inlined_call_operand.vmem [shape: f32[1,64], index: 4, kind: input, shape index: {}]
  %s5 = inlined_call_operand.vmem [shape: f32[2,128,64], index: 5, kind: output, shape index: {}]
  %s6 = sld [smem:[#allocation0]]
  $region53: #{tpu_custom_call.1} parent=0
    _
  %s8 = ssub.s32 1, %s6
  %s9 = scalar_select 0, %s8, %s6
  loop: start=0, step=1, limit=4
  $region2: #{tpu_custom_call.1} parent=0 // loop_pre_header
    _
  $region3: #{tpu_custom_call.1} parent=0 // loop_header
    %s11 = sphi 0, %s15
    %p12 = scmp.ge.s32.totalorder %s11, 4
    %s21 = sphi 0, %s23
    %s24 = sphi 0, %s21
    %s25 = sphi 0, %s24
    %s41 = sphi 0, %s25
    %s47 = sphi 0, %s49
    %s50 = sphi 0, %s47
    %s51 = sphi 0, %s50
    %s67 = sphi 0, %s51
    %s71 = sphi 0, %s71
    %s73 = sphi 0, %s71
    %s74 = sphi 0, %s73
    %s88 = sphi 0, %s74
    %s92 = sphi 0, %s92
    %s94 = sphi 0, %s92
    %s95 = sphi 0, %s94
    %s109 = sphi 0, %s95
    %s113 = sphi 0, %s113
    %s115 = sphi 0, %s113
    %s116 = sphi 0, %s115
    %s130 = sphi 0, %s116
    %s136 = sphi 0, %s138
    %s139 = sphi 0, %s136
    %s140 = sphi 0, %s139
    %s156 = sphi 0, %s140
  $region4: #{tpu_custom_call.1} parent=0 // loop_header_branch
    %14 = sbr.rel (%p12) target = $region8
  $region5: #{tpu_custom_call.1} parent=0 // loop_body
    %s16 = ssub.s32 %s11, 1
    %s17 = ssub.s32 %s11, 2
    %s18 = sadd.s32 %s11, 1
    %s19 = ssub.s32 %s11, %s18
    %p20 = scmp.eq.s32.totalorder %s19, 0
    %s22 = sadd.s32 %s21, 1
    %s23 = scalar_select %p20, %s21, %s22
    %p26 = pneg %p20
    %p27 = scmp.eq.s32.totalorder %s11, 1
    %p28 = por %p26, %p27
    %p29 = scmp.ne.s32.totalorder %s21, %s24
    %p30 = scmp.eq.s32.totalorder %s11, 0
    %p31 = por %p29, %p30
    %p32 = scmp.ne.s32.totalorder %s21, %s24
    %p33 = scmp.eq.s32.totalorder %s16, 1
    %p34 = por %p32, %p33
    %p35 = scmp.ne.s32.totalorder %s24, %s25
    %p36 = scmp.eq.s32.totalorder %s16, 0
    %p37 = por %p35, %p36
    %p38 = scmp.ne.s32.totalorder %s24, %s25
    %p39 = scmp.eq.s32.totalorder %s17, 1
    %p40 = por %p38, %p39
    %p42 = scmp.ne.s32.totalorder %s25, %s41
    %p43 = scmp.eq.s32.totalorder %s17, 0
    %p44 = por %p42, %p43
    %s45 = ssub.s32 %s11, %s18
    %p46 = scmp.eq.s32.totalorder %s45, 0
    %s48 = sadd.s32 %s47, 1
    %s49 = scalar_select %p46, %s47, %s48
    %p52 = pneg %p46
    %p53 = scmp.eq.s32.totalorder %s11, 1
    %p54 = por %p52, %p53
    %p55 = scmp.ne.s32.totalorder %s47, %s50
    %p56 = scmp.eq.s32.totalorder %s11, 0
    %p57 = por %p55, %p56
    %p58 = scmp.ne.s32.totalorder %s47, %s50
    %p59 = scmp.eq.s32.totalorder %s16, 1
    %p60 = por %p58, %p59
    %p61 = scmp.ne.s32.totalorder %s50, %s51
    %p62 = scmp.eq.s32.totalorder %s16, 0
    %p63 = por %p61, %p62
    %p64 = scmp.ne.s32.totalorder %s50, %s51
    %p65 = scmp.eq.s32.totalorder %s17, 1
    %p66 = por %p64, %p65
    %p68 = scmp.ne.s32.totalorder %s51, %s67
    %p69 = scmp.eq.s32.totalorder %s17, 0
    %p70 = por %p68, %p69
    %s72 = sadd.s32 %s71, 1
    %p75 = scmp.eq.s32.totalorder %s11, 1
    %p76 = scmp.ne.s32.totalorder %s71, %s73
    %p77 = scmp.eq.s32.totalorder %s11, 0
    %p78 = por %p76, %p77
    %p79 = scmp.ne.s32.totalorder %s71, %s73
    %p80 = scmp.eq.s32.totalorder %s16, 1
    %p81 = por %p79, %p80
    %p82 = scmp.ne.s32.totalorder %s73, %s74
    %p83 = scmp.eq.s32.totalorder %s16, 0
    %p84 = por %p82, %p83
    %p85 = scmp.ne.s32.totalorder %s73, %s74
    %p86 = scmp.eq.s32.totalorder %s17, 1
    %p87 = por %p85, %p86
    %p89 = scmp.ne.s32.totalorder %s74, %s88
    %p90 = scmp.eq.s32.totalorder %s17, 0
    %p91 = por %p89, %p90
    %s93 = sadd.s32 %s92, 1
    %p96 = scmp.eq.s32.totalorder %s11, 1
    %p97 = scmp.ne.s32.totalorder %s92, %s94
    %p98 = scmp.eq.s32.totalorder %s11, 0
    %p99 = por %p97, %p98
    %p100 = scmp.ne.s32.totalorder %s92, %s94
    %p101 = scmp.eq.s32.totalorder %s16, 1
    %p102 = por %p100, %p101
    %p103 = scmp.ne.s32.totalorder %s94, %s95
    %p104 = scmp.eq.s32.totalorder %s16, 0
    %p105 = por %p103, %p104
    %p106 = scmp.ne.s32.totalorder %s94, %s95
    %p107 = scmp.eq.s32.totalorder %s17, 1
    %p108 = por %p106, %p107
    %p110 = scmp.ne.s32.totalorder %s95, %s109
    %p111 = scmp.eq.s32.totalorder %s17, 0
    %p112 = por %p110, %p111
    %s114 = sadd.s32 %s113, 1
    %p117 = scmp.eq.s32.totalorder %s11, 1
    %p118 = scmp.ne.s32.totalorder %s113, %s115
    %p119 = scmp.eq.s32.totalorder %s11, 0
    %p120 = por %p118, %p119
    %p121 = scmp.ne.s32.totalorder %s113, %s115
    %p122 = scmp.eq.s32.totalorder %s16, 1
    %p123 = por %p121, %p122
    %p124 = scmp.ne.s32.totalorder %s115, %s116
    %p125 = scmp.eq.s32.totalorder %s16, 0
    %p126 = por %p124, %p125
    %p127 = scmp.ne.s32.totalorder %s115, %s116
    %p128 = scmp.eq.s32.totalorder %s17, 1
    %p129 = por %p127, %p128
    %p131 = scmp.ne.s32.totalorder %s116, %s130
    %p132 = scmp.eq.s32.totalorder %s17, 0
    %p133 = por %p131, %p132
    %s134 = ssub.s32 %s11, %s18
    %p135 = scmp.eq.s32.totalorder %s134, 0
    %s137 = sadd.s32 %s136, 1
    %s138 = scalar_select %p135, %s136, %s137
    %p141 = pneg %p135
    %p142 = scmp.eq.s32.totalorder %s11, 1
    %p143 = por %p141, %p142
    %p144 = scmp.ne.s32.totalorder %s136, %s139
    %p145 = scmp.eq.s32.totalorder %s11, 0
    %p146 = por %p144, %p145
    %p147 = scmp.ne.s32.totalorder %s136, %s139
    %p148 = scmp.eq.s32.totalorder %s16, 1
    %p149 = por %p147, %p148
    %p150 = scmp.ne.s32.totalorder %s139, %s140
    %p151 = scmp.eq.s32.totalorder %s16, 0
    %p152 = por %p150, %p151
    %p153 = scmp.ne.s32.totalorder %s139, %s140
    %p154 = scmp.eq.s32.totalorder %s17, 1
    %p155 = por %p153, %p154
    %p157 = scmp.ne.s32.totalorder %s140, %s156
    %p158 = scmp.eq.s32.totalorder %s17, 0
    %p159 = por %p157, %p158
    %p160 = scmp.le.s32.totalorder 1, %s11
    %p161 = scmp.lt.s32.totalorder %s11, 3
    %p162 = pnand %p160, %p161
    %p163 = pneg %p162
    // Predicated region
    $region9: #{tpu_custom_call.1} parent=5 // pred_check
      _
    $region10: #{tpu_custom_call.1} parent=5 // pred_check_branch
      %165 = sbr.rel (%p162) target = $region12
    $region11: #{tpu_custom_call.1} parent=5 // pred_region
      %s166 = ssub.s32 %s11, 1
      // Predicated region
      $region13: #{tpu_custom_call.1} parent=11 // pred_check
        %p167 = pneg %p84
      $region14: #{tpu_custom_call.1} parent=11 // pred_check_branch
        %169 = sbr.rel (%p167) target = $region16
      $region15: #{tpu_custom_call.1} parent=11 // pred_region
        _
      $region16: #{tpu_custom_call.1} parent=11 // pred_fallthru
        _
      // Predicated region
      $region17: #{tpu_custom_call.1} parent=11 // pred_check
        %p170 = pneg %p105
      $region18: #{tpu_custom_call.1} parent=11 // pred_check_branch
        %172 = sbr.rel (%p170) target = $region20
      $region19: #{tpu_custom_call.1} parent=11 // pred_region
        _
      $region20: #{tpu_custom_call.1} parent=11 // pred_fallthru
        _
      // Predicated region
      $region21: #{tpu_custom_call.1} parent=11 // pred_check
        %p173 = pneg %p126
      $region22: #{tpu_custom_call.1} parent=11 // pred_check_branch
        %175 = sbr.rel (%p173) target = $region24
      $region23: #{tpu_custom_call.1} parent=11 // pred_region
        _
      $region24: #{tpu_custom_call.1} parent=11 // pred_fallthru
        _
    $region12: #{tpu_custom_call.1} parent=5 // pred_fallthru
      _
    %p176 = scmp.lt.s32.totalorder %s11, 2
    // Predicated region
    $region25: #{tpu_custom_call.1} parent=5 // pred_check
      %p177 = pneg %p176
    $region26: #{tpu_custom_call.1} parent=5 // pred_check_branch
      %179 = sbr.rel (%p177) target = $region28
    $region27: #{tpu_custom_call.1} parent=5 // pred_region
      // Predicated region
      $region29: #{tpu_custom_call.1} parent=27 // pred_check
        %p180 = pneg %p31
      $region30: #{tpu_custom_call.1} parent=27 // pred_check_branch
        %182 = sbr.rel (%p180) target = $region32
      $region31: #{tpu_custom_call.1} parent=27 // pred_region
        %p183 = scmp.lt.s32.totalorder %s11, 1
        %s184 = scalar_select %p183, %s11, 1
        %s185 = smul.addr %s184, 16
        %s186 = smul.addr %s185, 8
        %s187 = scalar_lea.vmem %s0, %s186
      $region32: #{tpu_custom_call.1} parent=27 // pred_fallthru
        _
      // Predicated region
      $region33: #{tpu_custom_call.1} parent=27 // pred_check
        %p188 = pneg %p57
      $region34: #{tpu_custom_call.1} parent=27 // pred_check_branch
        %190 = sbr.rel (%p188) target = $region36
      $region35: #{tpu_custom_call.1} parent=27 // pred_region
        %p191 = scmp.lt.s32.totalorder %s11, 1
        %s192 = scalar_select %p191, %s11, 1
        %s193 = smul.addr %s192, 16
        %s194 = smul.addr %s193, 8
        %s195 = scalar_lea.vmem %s1, %s194
      $region36: #{tpu_custom_call.1} parent=27 // pred_fallthru
        _
    $region28: #{tpu_custom_call.1} parent=5 // pred_fallthru
      _
    %p196 = scmp.le.s32.totalorder 1, %s11
    %p197 = scmp.lt.s32.totalorder %s11, 3
    %p198 = pnand %p196, %p197
    %p199 = pneg %p198
    // Predicated region
    $region37: #{tpu_custom_call.1} parent=5 // pred_check
      _
    $region38: #{tpu_custom_call.1} parent=5 // pred_check_branch
      %201 = sbr.rel (%p198) target = $region40
    $region39: #{tpu_custom_call.1} parent=5 // pred_region
      %s202 = ssub.s32 %s11, 1
      %p203 = scmp.lt.s32.totalorder %s16, 1
      %s204 = scalar_select %p203, %s16, 1
      %s205 = smul.addr %s204, 16
      %s206 = smul.addr %s205, 8
      %s207 = scalar_lea.vmem %s0, %s206
      %p208 = pneg %p37
      %p209 = pneg %p34
      %p210 = scmp.lt.s32.totalorder %s16, 1
      %s211 = scalar_select %p210, %s16, 1
      %s212 = smul.addr %s211, 16
      %s213 = smul.addr %s212, 8
      %s214 = scalar_lea.vmem %s1, %s213
      %p215 = pneg %p63
      %p216 = pneg %p60
      %p217 = pneg %p84
      %p218 = pneg %p81
      %p219 = pneg %p105
      %p220 = pneg %p102
      %p221 = pneg %p126
      %p222 = pneg %p123
      %p223 = pneg %p152
      %p224 = pneg %p149
      %p225 = scmp.lt.s32.totalorder %s16, 1
      %s226 = scalar_select %p225, %s16, 1
      %s227 = smul.addr %s226, 16
      %s228 = smul.addr %s227, 8
      %s229 = scalar_lea.vmem %s5, %s228
      %p230 = scmp.lt.s32.totalorder %s16, 1
      %s231 = scalar_select %p230, %s16, 1
      %s232 = smul.addr %s231, 16
      %s233 = smul.addr %s232, 8
      %s234 = scalar_lea.vmem %s0, %s233
      %p235 = scmp.lt.s32.totalorder %s16, 1
      %s236 = scalar_select %p235, %s16, 1
      %s237 = smul.addr %s236, 16
      %s238 = smul.addr %s237, 8
      %s239 = scalar_lea.vmem %s1, %s238
      %p240 = scmp.lt.s32.totalorder %s16, 1
      %s241 = scalar_select %p240, %s16, 1
      %s242 = smul.addr %s241, 16
      %s243 = smul.addr %s242, 8
      %s244 = scalar_lea.vmem %s5, %s243
      %v245 = vld [vmem:[%s234] sm:$0xff]
      %v246 = vld [vmem:[%s234 + $0x8] sm:$0xff]
      %v247 = vld [vmem:[%s234 + $0x10] sm:$0xff]
      %v248 = vld [vmem:[%s234 + $0x18] sm:$0xff]
      %v249 = vld [vmem:[%s234 + $0x20] sm:$0xff]
      %v250 = vld [vmem:[%s234 + $0x28] sm:$0xff]
      %v251 = vld [vmem:[%s234 + $0x30] sm:$0xff]
      %v252 = vld [vmem:[%s234 + $0x38] sm:$0xff]
      %v253 = vld [vmem:[%s234 + $0x40] sm:$0xff]
      %v254 = vld [vmem:[%s234 + $0x48] sm:$0xff]
      %v255 = vld [vmem:[%s234 + $0x50] sm:$0xff]
      %v256 = vld [vmem:[%s234 + $0x58] sm:$0xff]
      %v257 = vld [vmem:[%s234 + $0x60] sm:$0xff]
      %v258 = vld [vmem:[%s234 + $0x68] sm:$0xff]
      %v259 = vld [vmem:[%s234 + $0x70] sm:$0xff]
      %v260 = vld [vmem:[%s234 + $0x78] sm:$0xff]
      %v261 = vld [vmem:[%s239] sm:$0xff]
      %v262 = vld [vmem:[%s239 + $0x8] sm:$0xff]
      %v263 = vld [vmem:[%s239 + $0x10] sm:$0xff]
      %v264 = vld [vmem:[%s239 + $0x18] sm:$0xff]
      %v265 = vld [vmem:[%s239 + $0x20] sm:$0xff]
      %v266 = vld [vmem:[%s239 + $0x28] sm:$0xff]
      %v267 = vld [vmem:[%s239 + $0x30] sm:$0xff]
      %v268 = vld [vmem:[%s239 + $0x38] sm:$0xff]
      %v269 = vld [vmem:[%s239 + $0x40] sm:$0xff]
      %v270 = vld [vmem:[%s239 + $0x48] sm:$0xff]
      %v271 = vld [vmem:[%s239 + $0x50] sm:$0xff]
      %v272 = vld [vmem:[%s239 + $0x58] sm:$0xff]
      %v273 = vld [vmem:[%s239 + $0x60] sm:$0xff]
      %v274 = vld [vmem:[%s239 + $0x68] sm:$0xff]
      %v275 = vld [vmem:[%s239 + $0x70] sm:$0xff]
      %v276 = vld [vmem:[%s239 + $0x78] sm:$0xff]
      %v277 = vld [vmem:[%s2] sm:$0xff]
      %v278 = vld [vmem:[%s2 + $0x8] sm:$0xff]
      %v279 = vld [vmem:[%s2 + $0x10] sm:$0xff]
      %v280 = vld [vmem:[%s2 + $0x18] sm:$0xff]
      %v281 = vld [vmem:[%s3] sm:$0x1]
      %v282 = vld [vmem:[%s4] sm:$0x1]
      %vm283 = vcmask 261120
      %v285 = vsel %vm283, %v245, 0
      %v288 = vsel %vm283, %v246, 0
      %v291 = vsel %vm283, %v247, 0
      %v294 = vsel %vm283, %v248, 0
      %v297 = vsel %vm283, %v249, 0
      %v300 = vsel %vm283, %v250, 0
      %v303 = vsel %vm283, %v251, 0
      %v306 = vsel %vm283, %v252, 0
      %v309 = vsel %vm283, %v253, 0
      %v312 = vsel %vm283, %v254, 0
      %v315 = vsel %vm283, %v255, 0
      %v318 = vsel %vm283, %v256, 0
      %v321 = vsel %vm283, %v257, 0
      %v324 = vsel %vm283, %v258, 0
      %v327 = vsel %vm283, %v259, 0
      %v330 = vsel %vm283, %v260, 0
      %332 = vmatprep.subr.mxu0 0.0
      %333 = vmatpush1.msra.mxu0 %v277
      %334 = vmatprep.subr.mxu0 0.0
      %335 = vmatpush1.msra.mxu0 %v278
      %336 = vmatprep.subr.mxu0 0.0
      %337 = vmatpush1.msra.mxu0 %v279
      %338 = vmatprep.subr.mxu0 0.0
      %339 = vmatpush1.msra.mxu0 %v280
      %340 = vmatprep.subr.mxu0 0.0
      %341 = vmatpush1.msra.mxu0 0.0
      %342 = vmatprep.subr.mxu0 0.0
      %343 = vmatpush1.msra.mxu0 0.0
      %344 = vmatprep.subr.mxu0 0.0
      %345 = vmatpush1.msra.mxu0 0.0
      %346 = vmatprep.subr.mxu0 0.0
      %347 = vmatpush1.msra.mxu0 0.0
      %348 = vmatprep.subr.mxu0 0.0
      %349 = vmatpush1.msra.mxu0 0.0
      %350 = vmatprep.subr.mxu0 0.0
      %351 = vmatpush1.msra.mxu0 0.0
      %352 = vmatprep.subr.mxu0 0.0
      %353 = vmatpush1.msra.mxu0 0.0
      %354 = vmatprep.subr.mxu0 0.0
      %355 = vmatpush1.msra.mxu0 0.0
      %356 = vmatprep.subr.mxu0 0.0
      %357 = vmatpush1.msra.mxu0 0.0
      %358 = vmatprep.subr.mxu0 0.0
      %359 = vmatpush1.msra.mxu0 0.0
      %360 = vmatprep.subr.mxu0 0.0
      %361 = vmatpush1.msra.mxu0 0.0
      %362 = vmatprep.subr.mxu0 0.0
      %363 = vmatpush1.msra.mxu0 0.0
      %364 = vmatprep.subr.mxu0 0.0
      %365 = vmatpush1.msra.mxu0 0.0
      %366 = vmatprep.subr.mxu0 0.0
      %367 = vmatpush1.msra.mxu0 0.0
      %368 = vmatprep.subr.mxu0 0.0
      %369 = vmatpush1.msra.mxu0 0.0
      %370 = vmatprep.subr.mxu0 0.0
      %371 = vmatpush1.msra.mxu0 0.0
      %372 = vmatprep.subr.mxu0 0.0
      %373 = vmatpush1.msra.mxu0 0.0
      %374 = vmatprep.subr.mxu0 0.0
      %375 = vmatpush1.msra.mxu0 0.0
      %376 = vmatprep.subr.mxu0 0.0
      %377 = vmatpush1.msra.mxu0 0.0
      %378 = vmatprep.subr.mxu0 0.0
      %379 = vmatpush1.msra.mxu0 0.0
      %380 = vmatprep.subr.mxu0 0.0
      %381 = vmatpush1.msra.mxu0 0.0
      %382 = vmatprep.subr.mxu0 0.0
      %383 = vmatpush1.msra.mxu0 0.0
      %384 = vmatprep.subr.mxu0 0.0
      %385 = vmatpush1.msra.mxu0 0.0
      %386 = vmatprep.subr.mxu0 0.0
      %387 = vmatpush1.msra.mxu0 0.0
      %388 = vmatprep.subr.mxu0 0.0
      %389 = vmatpush1.msra.mxu0 0.0
      %390 = vmatprep.subr.mxu0 0.0
      %391 = vmatpush1.msra.mxu0 0.0
      %392 = vmatprep.subr.mxu0 0.0
      %393 = vmatpush1.msra.mxu0 0.0
      %394 = vmatprep.subr.mxu0 0.0
      %395 = vmatpush1.msra.mxu0 0.0
      %396 = vmatprep.mubr.f32.mxu0 0.0
      %397 = vmatmul.mubr.f32.gmra.mrb[0].mxu0 %v285
      %v398 = vpop.f32.mrb[0].mxu0
      %v399 = vadd.f32 0.0, %v398
      %v400 = vpop.f32.mrb[0].mxu0
      %401 = vmatprep.mubr.f32.mxu0 0.0
      %402 = vmatmul.mubr.f32.gmra.mrb[0].mxu0 %v288
      %v403 = vpop.f32.mrb[0].mxu0
      %v404 = vadd.f32 0.0, %v403
      %v405 = vpop.f32.mrb[0].mxu0
      %406 = vmatprep.mubr.f32.mxu0 0.0
      %407 = vmatmul.mubr.f32.gmra.mrb[0].mxu0 %v291
      %v408 = vpop.f32.mrb[0].mxu0
      %v409 = vadd.f32 0.0, %v408
      %v410 = vpop.f32.mrb[0].mxu0
      %411 = vmatprep.mubr.f32.mxu0 0.0
      %412 = vmatmul.mubr.f32.gmra.mrb[0].mxu0 %v294
      %v413 = vpop.f32.mrb[0].mxu0
      %v414 = vadd.f32 0.0, %v413
      %v415 = vpop.f32.mrb[0].mxu0
      %416 = vmatprep.mubr.f32.mxu0 0.0
      %417 = vmatmul.mubr.f32.gmra.mrb[0].mxu0 %v297
      %v418 = vpop.f32.mrb[0].mxu0
      %v419 = vadd.f32 0.0, %v418
      %v420 = vpop.f32.mrb[0].mxu0
      %421 = vmatprep.mubr.f32.mxu0 0.0
      %422 = vmatmul.mubr.f32.gmra.mrb[0].mxu0 %v300
      %v423 = vpop.f32.mrb[0].mxu0
      %v424 = vadd.f32 0.0, %v423
      %v425 = vpop.f32.mrb[0].mxu0
      %426 = vmatprep.mubr.f32.mxu0 0.0
      %427 = vmatmul.mubr.f32.gmra.mrb[0].mxu0 %v303
      %v428 = vpop.f32.mrb[0].mxu0
      %v429 = vadd.f32 0.0, %v428
      %v430 = vpop.f32.mrb[0].mxu0
      %431 = vmatprep.mubr.f32.mxu0 0.0
      %432 = vmatmul.mubr.f32.gmra.mrb[0].mxu0 %v306
      %v433 = vpop.f32.mrb[0].mxu0
      %v434 = vadd.f32 0.0, %v433
      %v435 = vpop.f32.mrb[0].mxu0
      %436 = vmatprep.mubr.f32.mxu0 0.0
      %437 = vmatmul.mubr.f32.gmra.mrb[0].mxu0 %v309
      %v438 = vpop.f32.mrb[0].mxu0
      %v439 = vadd.f32 0.0, %v438
      %v440 = vpop.f32.mrb[0].mxu0
      %441 = vmatprep.mubr.f32.mxu0 0.0
      %442 = vmatmul.mubr.f32.gmra.mrb[0].mxu0 %v312
      %v443 = vpop.f32.mrb[0].mxu0
      %v444 = vadd.f32 0.0, %v443
      %v445 = vpop.f32.mrb[0].mxu0
      %446 = vmatprep.mubr.f32.mxu0 0.0
      %447 = vmatmul.mubr.f32.gmra.mrb[0].mxu0 %v315
      %v448 = vpop.f32.mrb[0].mxu0
      %v449 = vadd.f32 0.0, %v448
      %v450 = vpop.f32.mrb[0].mxu0
      %451 = vmatprep.mubr.f32.mxu0 0.0
      %452 = vmatmul.mubr.f32.gmra.mrb[0].mxu0 %v318
      %v453 = vpop.f32.mrb[0].mxu0
      %v454 = vadd.f32 0.0, %v453
      %v455 = vpop.f32.mrb[0].mxu0
      %456 = vmatprep.mubr.f32.mxu0 0.0
      %457 = vmatmul.mubr.f32.gmra.mrb[0].mxu0 %v321
      %v458 = vpop.f32.mrb[0].mxu0
      %v459 = vadd.f32 0.0, %v458
      %v460 = vpop.f32.mrb[0].mxu0
      %461 = vmatprep.mubr.f32.mxu0 0.0
      %462 = vmatmul.mubr.f32.gmra.mrb[0].mxu0 %v324
      %v463 = vpop.f32.mrb[0].mxu0
      %v464 = vadd.f32 0.0, %v463
      %v465 = vpop.f32.mrb[0].mxu0
      %466 = vmatprep.mubr.f32.mxu0 0.0
      %467 = vmatmul.mubr.f32.gmra.mrb[0].mxu0 %v327
      %v468 = vpop.f32.mrb[0].mxu0
      %v469 = vadd.f32 0.0, %v468
      %v470 = vpop.f32.mrb[0].mxu0
      %471 = vmatprep.mubr.f32.mxu0 0.0
      %472 = vmatmul.mubr.f32.gmra.mrb[0].mxu0 %v330
      %v473 = vpop.f32.mrb[0].mxu0
      %v474 = vadd.f32 0.0, %v473
      %v475 = vpop.f32.mrb[0].mxu0
      %476 = vdwg.mxu0
      %v478 = vlaneseq
      %v479 = vshrl.u32 %v478, 7
      %v480 = vsub.s32 0, %v479
      %v481 = vrot.slane %v281, %v480
      %v483 = vmul.f32 %v399, %v481
      %v484 = vmul.f32 %v404, %v481
      %v485 = vmul.f32 %v409, %v481
      %v486 = vmul.f32 %v414, %v481
      %v487 = vmul.f32 %v419, %v481
      %v488 = vmul.f32 %v424, %v481
      %v489 = vmul.f32 %v429, %v481
      %v490 = vmul.f32 %v434, %v481
      %v491 = vmul.f32 %v439, %v481
      %v492 = vmul.f32 %v444, %v481
      %v493 = vmul.f32 %v449, %v481
      %v494 = vmul.f32 %v454, %v481
      %v495 = vmul.f32 %v459, %v481
      %v496 = vmul.f32 %v464, %v481
      %v497 = vmul.f32 %v469, %v481
      %v498 = vmul.f32 %v474, %v481
      %vm499 = vcmask 523264
      %v500 = vsel %vm499, %v483, 0.0
      %501 = vadd.xlane.f32.xlu0 %v500
      %v502 = vpop.xlane.xlu0 %501
      %v503 = vsel %vm499, %v484, 0.0
      %504 = vadd.xlane.f32.xlu0 %v503
      %v505 = vpop.xlane.xlu0 %504
      %v506 = vsel %vm499, %v485, 0.0
      %507 = vadd.xlane.f32.xlu0 %v506
      %v508 = vpop.xlane.xlu0 %507
      %v509 = vsel %vm499, %v486, 0.0
      %510 = vadd.xlane.f32.xlu0 %v509
      %v511 = vpop.xlane.xlu0 %510
      %v512 = vsel %vm499, %v487, 0.0
      %513 = vadd.xlane.f32.xlu0 %v512
      %v514 = vpop.xlane.xlu0 %513
      %v515 = vsel %vm499, %v488, 0.0
      %516 = vadd.xlane.f32.xlu0 %v515
      %v517 = vpop.xlane.xlu0 %516
      %v518 = vsel %vm499, %v489, 0.0
      %519 = vadd.xlane.f32.xlu0 %v518
      %v520 = vpop.xlane.xlu0 %519
      %v521 = vsel %vm499, %v490, 0.0
      %522 = vadd.xlane.f32.xlu0 %v521
      %v523 = vpop.xlane.xlu0 %522
      %v524 = vsel %vm499, %v491, 0.0
      %525 = vadd.xlane.f32.xlu0 %v524
      %v526 = vpop.xlane.xlu0 %525
      %v527 = vsel %vm499, %v492, 0.0
      %528 = vadd.xlane.f32.xlu0 %v527
      %v529 = vpop.xlane.xlu0 %528
      %v530 = vsel %vm499, %v493, 0.0
      %531 = vadd.xlane.f32.xlu0 %v530
      %v532 = vpop.xlane.xlu0 %531
      %v533 = vsel %vm499, %v494, 0.0
      %534 = vadd.xlane.f32.xlu0 %v533
      %v535 = vpop.xlane.xlu0 %534
      %v536 = vsel %vm499, %v495, 0.0
      %537 = vadd.xlane.f32.xlu0 %v536
      %v538 = vpop.xlane.xlu0 %537
      %v539 = vsel %vm499, %v496, 0.0
      %540 = vadd.xlane.f32.xlu0 %v539
      %v541 = vpop.xlane.xlu0 %540
      %v542 = vsel %vm499, %v497, 0.0
      %543 = vadd.xlane.f32.xlu0 %v542
      %v544 = vpop.xlane.xlu0 %543
      %v545 = vsel %vm499, %v498, 0.0
      %546 = vadd.xlane.f32.xlu0 %v545
      %v547 = vpop.xlane.xlu0 %546
      %v549 = vsel %vm499, %v282, 0
      %v552 = vsel %vm499, %v399, 0
      %v555 = vsel %vm499, %v404, 0
      %v558 = vsel %vm499, %v409, 0
      %v561 = vsel %vm499, %v414, 0
      %v564 = vsel %vm499, %v419, 0
      %v567 = vsel %vm499, %v424, 0
      %v570 = vsel %vm499, %v429, 0
      %v573 = vsel %vm499, %v434, 0
      %v576 = vsel %vm499, %v439, 0
      %v579 = vsel %vm499, %v444, 0
      %v582 = vsel %vm499, %v449, 0
      %v585 = vsel %vm499, %v454, 0
      %v588 = vsel %vm499, %v459, 0
      %v591 = vsel %vm499, %v464, 0
      %v594 = vsel %vm499, %v469, 0
      %v597 = vsel %vm499, %v474, 0
      %599 = vmatprep.subr.mxu0 0.0
      %600 = vmatpush1.xpose.msra.mxu0 %v552
      %601 = vmatprep.subr.mxu0 0.0
      %602 = vmatpush1.xpose.msra.mxu0 %v555
      %603 = vmatprep.subr.mxu0 0.0
      %604 = vmatpush1.xpose.msra.mxu0 %v558
      %605 = vmatprep.subr.mxu0 0.0
      %606 = vmatpush1.xpose.msra.mxu0 %v561
      %607 = vmatprep.subr.mxu0 0.0
      %608 = vmatpush1.xpose.msra.mxu0 %v564
      %609 = vmatprep.subr.mxu0 0.0
      %610 = vmatpush1.xpose.msra.mxu0 %v567
      %611 = vmatprep.subr.mxu0 0.0
      %612 = vmatpush1.xpose.msra.mxu0 %v570
      %613 = vmatprep.subr.mxu0 0.0
      %614 = vmatpush1.xpose.msra.mxu0 %v573
      %615 = vmatprep.subr.mxu0 0.0
      %616 = vmatpush1.xpose.msra.mxu0 %v576
      %617 = vmatprep.subr.mxu0 0.0
      %618 = vmatpush1.xpose.msra.mxu0 %v579
      %619 = vmatprep.subr.mxu0 0.0
      %620 = vmatpush1.xpose.msra.mxu0 %v582
      %621 = vmatprep.subr.mxu0 0.0
      %622 = vmatpush1.xpose.msra.mxu0 %v585
      %623 = vmatprep.subr.mxu0 0.0
      %624 = vmatpush1.xpose.msra.mxu0 %v588
      %625 = vmatprep.subr.mxu0 0.0
      %626 = vmatpush1.xpose.msra.mxu0 %v591
      %627 = vmatprep.subr.mxu0 0.0
      %628 = vmatpush1.xpose.msra.mxu0 %v594
      %629 = vmatprep.subr.mxu0 0.0
      %630 = vmatpush1.xpose.msra.mxu0 %v597
      %631 = vmatprep.subr.mxu0 0.0
      %632 = vmatpush1.xpose.msra.mxu0 0.0
      %633 = vmatprep.subr.mxu0 0.0
      %634 = vmatpush1.xpose.msra.mxu0 0.0
      %635 = vmatprep.subr.mxu0 0.0
      %636 = vmatpush1.xpose.msra.mxu0 0.0
      %637 = vmatprep.subr.mxu0 0.0
      %638 = vmatpush1.xpose.msra.mxu0 0.0
      %639 = vmatprep.subr.mxu0 0.0
      %640 = vmatpush1.xpose.msra.mxu0 0.0
      %641 = vmatprep.subr.mxu0 0.0
      %642 = vmatpush1.xpose.msra.mxu0 0.0
      %643 = vmatprep.subr.mxu0 0.0
      %644 = vmatpush1.xpose.msra.mxu0 0.0
      %645 = vmatprep.subr.mxu0 0.0
      %646 = vmatpush1.xpose.msra.mxu0 0.0
      %647 = vmatprep.subr.mxu0 0.0
      %648 = vmatpush1.xpose.msra.mxu0 0.0
      %649 = vmatprep.subr.mxu0 0.0
      %650 = vmatpush1.xpose.msra.mxu0 0.0
      %651 = vmatprep.subr.mxu0 0.0
      %652 = vmatpush1.xpose.msra.mxu0 0.0
      %653 = vmatprep.subr.mxu0 0.0
      %654 = vmatpush1.xpose.msra.mxu0 0.0
      %655 = vmatprep.subr.mxu0 0.0
      %656 = vmatpush1.xpose.msra.mxu0 0.0
      %657 = vmatprep.subr.mxu0 0.0
      %658 = vmatpush1.xpose.msra.mxu0 0.0
      %659 = vmatprep.subr.mxu0 0.0
      %660 = vmatpush1.xpose.msra.mxu0 0.0
      %661 = vmatprep.subr.mxu0 0.0
      %662 = vmatpush1.xpose.msra.mxu0 0.0
      %663 = vmatprep.mubr.f32.mxu0 0.0
      %664 = vmatmul.mubr.f32.gmra.mrb[0].mxu0 %v549
      %v665 = vpop.f32.mrb[0].mxu0
      %v666 = vadd.f32 0.0, %v665
      %v667 = vpop.f32.mrb[0].mxu0
      %668 = vdwg.mxu0
      %v669 = vlaneseq
      %v670 = vshrl.u32 %v669, 7
      %v671 = vsub.s32 0, %v670
      %v672 = vrot.slane %v666, %v671
      %v673 = vadd.f32 %v502, %v672
      %v674 = vadd.f32 %v505, %v672
      %v675 = vadd.f32 %v508, %v672
      %v676 = vadd.f32 %v511, %v672
      %v677 = vadd.f32 %v514, %v672
      %v678 = vadd.f32 %v517, %v672
      %v679 = vadd.f32 %v520, %v672
      %v680 = vadd.f32 %v523, %v672
      %v681 = vadd.f32 %v526, %v672
      %v682 = vadd.f32 %v529, %v672
      %v683 = vadd.f32 %v532, %v672
      %v684 = vadd.f32 %v535, %v672
      %v685 = vadd.f32 %v538, %v672
      %v686 = vadd.f32 %v541, %v672
      %v687 = vadd.f32 %v544, %v672
      %v688 = vadd.f32 %v547, %v672
      %vm689 = vcmp.gt.f32.partialorder %v673, 0.0
      %vm690 = vcmp.gt.f32.partialorder %v674, 0.0
      %vm691 = vcmp.gt.f32.partialorder %v675, 0.0
      %vm692 = vcmp.gt.f32.partialorder %v676, 0.0
      %vm693 = vcmp.gt.f32.partialorder %v677, 0.0
      %vm694 = vcmp.gt.f32.partialorder %v678, 0.0
      %vm695 = vcmp.gt.f32.partialorder %v679, 0.0
      %vm696 = vcmp.gt.f32.partialorder %v680, 0.0
      %vm697 = vcmp.gt.f32.partialorder %v681, 0.0
      %vm698 = vcmp.gt.f32.partialorder %v682, 0.0
      %vm699 = vcmp.gt.f32.partialorder %v683, 0.0
      %vm700 = vcmp.gt.f32.partialorder %v684, 0.0
      %vm701 = vcmp.gt.f32.partialorder %v685, 0.0
      %vm702 = vcmp.gt.f32.partialorder %v686, 0.0
      %vm703 = vcmp.gt.f32.partialorder %v687, 0.0
      %vm704 = vcmp.gt.f32.partialorder %v688, 0.0
      %v705 = vmul.f32 %v673, 0.2
      %v706 = vmul.f32 %v674, 0.2
      %v707 = vmul.f32 %v675, 0.2
      %v708 = vmul.f32 %v676, 0.2
      %v709 = vmul.f32 %v677, 0.2
      %v710 = vmul.f32 %v678, 0.2
      %v711 = vmul.f32 %v679, 0.2
      %v712 = vmul.f32 %v680, 0.2
      %v713 = vmul.f32 %v681, 0.2
      %v714 = vmul.f32 %v682, 0.2
      %v715 = vmul.f32 %v683, 0.2
      %v716 = vmul.f32 %v684, 0.2
      %v717 = vmul.f32 %v685, 0.2
      %v718 = vmul.f32 %v686, 0.2
      %v719 = vmul.f32 %v687, 0.2
      %v720 = vmul.f32 %v688, 0.2
      %v721 = vsel %vm689, %v673, %v705
      %v722 = vsel %vm690, %v674, %v706
      %v723 = vsel %vm691, %v675, %v707
      %v724 = vsel %vm692, %v676, %v708
      %v725 = vsel %vm693, %v677, %v709
      %v726 = vsel %vm694, %v678, %v710
      %v727 = vsel %vm695, %v679, %v711
      %v728 = vsel %vm696, %v680, %v712
      %v729 = vsel %vm697, %v681, %v713
      %v730 = vsel %vm698, %v682, %v714
      %v731 = vsel %vm699, %v683, %v715
      %v732 = vsel %vm700, %v684, %v716
      %v733 = vsel %vm701, %v685, %v717
      %v734 = vsel %vm702, %v686, %v718
      %v735 = vsel %vm703, %v687, %v719
      %v736 = vsel %vm704, %v688, %v720
      %vm737 = vcmp.gt.f32.partialorder %v261, 0.0
      %vm738 = vcmp.gt.f32.partialorder %v262, 0.0
      %vm739 = vcmp.gt.f32.partialorder %v263, 0.0
      %vm740 = vcmp.gt.f32.partialorder %v264, 0.0
      %vm741 = vcmp.gt.f32.partialorder %v265, 0.0
      %vm742 = vcmp.gt.f32.partialorder %v266, 0.0
      %vm743 = vcmp.gt.f32.partialorder %v267, 0.0
      %vm744 = vcmp.gt.f32.partialorder %v268, 0.0
      %vm745 = vcmp.gt.f32.partialorder %v269, 0.0
      %vm746 = vcmp.gt.f32.partialorder %v270, 0.0
      %vm747 = vcmp.gt.f32.partialorder %v271, 0.0
      %vm748 = vcmp.gt.f32.partialorder %v272, 0.0
      %vm749 = vcmp.gt.f32.partialorder %v273, 0.0
      %vm750 = vcmp.gt.f32.partialorder %v274, 0.0
      %vm751 = vcmp.gt.f32.partialorder %v275, 0.0
      %vm752 = vcmp.gt.f32.partialorder %v276, 0.0
      %v753 = vsel %vm737, %v721, -9e+15
      %v754 = vsel %vm738, %v722, -9e+15
      %v755 = vsel %vm739, %v723, -9e+15
      %v756 = vsel %vm740, %v724, -9e+15
      %v757 = vsel %vm741, %v725, -9e+15
      %v758 = vsel %vm742, %v726, -9e+15
      %v759 = vsel %vm743, %v727, -9e+15
      %v760 = vsel %vm744, %v728, -9e+15
      %v761 = vsel %vm745, %v729, -9e+15
      %v762 = vsel %vm746, %v730, -9e+15
      %v763 = vsel %vm747, %v731, -9e+15
      %v764 = vsel %vm748, %v732, -9e+15
      %v765 = vsel %vm749, %v733, -9e+15
      %v766 = vsel %vm750, %v734, -9e+15
      %v767 = vsel %vm751, %v735, -9e+15
      %v768 = vsel %vm752, %v736, -9e+15
      %769 = vmax.xlane.f32.xlu0 %v753
      %v770 = vpop.xlane.xlu0 %769
      %771 = vmax.xlane.f32.xlu0 %v754
      %v772 = vpop.xlane.xlu0 %771
      %773 = vmax.xlane.f32.xlu0 %v755
      %v774 = vpop.xlane.xlu0 %773
      %775 = vmax.xlane.f32.xlu0 %v756
      %v776 = vpop.xlane.xlu0 %775
      %777 = vmax.xlane.f32.xlu0 %v757
      %v778 = vpop.xlane.xlu0 %777
      %779 = vmax.xlane.f32.xlu0 %v758
      %v780 = vpop.xlane.xlu0 %779
      %781 = vmax.xlane.f32.xlu0 %v759
      %v782 = vpop.xlane.xlu0 %781
      %783 = vmax.xlane.f32.xlu0 %v760
      %v784 = vpop.xlane.xlu0 %783
      %785 = vmax.xlane.f32.xlu0 %v761
      %v786 = vpop.xlane.xlu0 %785
      %787 = vmax.xlane.f32.xlu0 %v762
      %v788 = vpop.xlane.xlu0 %787
      %789 = vmax.xlane.f32.xlu0 %v763
      %v790 = vpop.xlane.xlu0 %789
      %791 = vmax.xlane.f32.xlu0 %v764
      %v792 = vpop.xlane.xlu0 %791
      %793 = vmax.xlane.f32.xlu0 %v765
      %v794 = vpop.xlane.xlu0 %793
      %795 = vmax.xlane.f32.xlu0 %v766
      %v796 = vpop.xlane.xlu0 %795
      %797 = vmax.xlane.f32.xlu0 %v767
      %v798 = vpop.xlane.xlu0 %797
      %799 = vmax.xlane.f32.xlu0 %v768
      %v800 = vpop.xlane.xlu0 %799
      %v801 = vsub.f32 %v753, %v770
      %v802 = vsub.f32 %v754, %v772
      %v803 = vsub.f32 %v755, %v774
      %v804 = vsub.f32 %v756, %v776
      %v805 = vsub.f32 %v757, %v778
      %v806 = vsub.f32 %v758, %v780
      %v807 = vsub.f32 %v759, %v782
      %v808 = vsub.f32 %v760, %v784
      %v809 = vsub.f32 %v761, %v786
      %v810 = vsub.f32 %v762, %v788
      %v811 = vsub.f32 %v763, %v790
      %v812 = vsub.f32 %v764, %v792
      %v813 = vsub.f32 %v765, %v794
      %v814 = vsub.f32 %v766, %v796
      %v815 = vsub.f32 %v767, %v798
      %v816 = vsub.f32 %v768, %v800
      %v817 = vmul.f32 %v801, 1.442695
      %v818 = vpow.pop %v817
      %v819 = vmul.f32 %v802, 1.442695
      %v820 = vpow.pop %v819
      %v821 = vmul.f32 %v803, 1.442695
      %v822 = vpow.pop %v821
      %v823 = vmul.f32 %v804, 1.442695
      %v824 = vpow.pop %v823
      %v825 = vmul.f32 %v805, 1.442695
      %v826 = vpow.pop %v825
      %v827 = vmul.f32 %v806, 1.442695
      %v828 = vpow.pop %v827
      %v829 = vmul.f32 %v807, 1.442695
      %v830 = vpow.pop %v829
      %v831 = vmul.f32 %v808, 1.442695
      %v832 = vpow.pop %v831
      %v833 = vmul.f32 %v809, 1.442695
      %v834 = vpow.pop %v833
      %v835 = vmul.f32 %v810, 1.442695
      %v836 = vpow.pop %v835
      %v837 = vmul.f32 %v811, 1.442695
      %v838 = vpow.pop %v837
      %v839 = vmul.f32 %v812, 1.442695
      %v840 = vpow.pop %v839
      %v841 = vmul.f32 %v813, 1.442695
      %v842 = vpow.pop %v841
      %v843 = vmul.f32 %v814, 1.442695
      %v844 = vpow.pop %v843
      %v845 = vmul.f32 %v815, 1.442695
      %v846 = vpow.pop %v845
      %v847 = vmul.f32 %v816, 1.442695
      %v848 = vpow.pop %v847
      %849 = vadd.xlane.f32.xlu0 %v818
      %v850 = vpop.xlane.xlu0 %849
      %851 = vadd.xlane.f32.xlu0 %v820
      %v852 = vpop.xlane.xlu0 %851
      %853 = vadd.xlane.f32.xlu0 %v822
      %v854 = vpop.xlane.xlu0 %853
      %855 = vadd.xlane.f32.xlu0 %v824
      %v856 = vpop.xlane.xlu0 %855
      %857 = vadd.xlane.f32.xlu0 %v826
      %v858 = vpop.xlane.xlu0 %857
      %859 = vadd.xlane.f32.xlu0 %v828
      %v860 = vpop.xlane.xlu0 %859
      %861 = vadd.xlane.f32.xlu0 %v830
      %v862 = vpop.xlane.xlu0 %861
      %863 = vadd.xlane.f32.xlu0 %v832
      %v864 = vpop.xlane.xlu0 %863
      %865 = vadd.xlane.f32.xlu0 %v834
      %v866 = vpop.xlane.xlu0 %865
      %867 = vadd.xlane.f32.xlu0 %v836
      %v868 = vpop.xlane.xlu0 %867
      %869 = vadd.xlane.f32.xlu0 %v838
      %v870 = vpop.xlane.xlu0 %869
      %871 = vadd.xlane.f32.xlu0 %v840
      %v872 = vpop.xlane.xlu0 %871
      %873 = vadd.xlane.f32.xlu0 %v842
      %v874 = vpop.xlane.xlu0 %873
      %875 = vadd.xlane.f32.xlu0 %v844
      %v876 = vpop.xlane.xlu0 %875
      %877 = vadd.xlane.f32.xlu0 %v846
      %v878 = vpop.xlane.xlu0 %877
      %879 = vadd.xlane.f32.xlu0 %v848
      %v880 = vpop.xlane.xlu0 %879
      %v881 = vrcp.pop %v850
      %v882 = vrcp.pop %v852
      %v883 = vrcp.pop %v854
      %v884 = vrcp.pop %v856
      %v885 = vrcp.pop %v858
      %v886 = vrcp.pop %v860
      %v887 = vrcp.pop %v862
      %v888 = vrcp.pop %v864
      %v889 = vrcp.pop %v866
      %v890 = vrcp.pop %v868
      %v891 = vrcp.pop %v870
      %v892 = vrcp.pop %v872
      %v893 = vrcp.pop %v874
      %v894 = vrcp.pop %v876
      %v895 = vrcp.pop %v878
      %v896 = vrcp.pop %v880
      %v897 = vmul.f32 %v818, %v881
      %v898 = vmul.f32 %v820, %v882
      %v899 = vmul.f32 %v822, %v883
      %v900 = vmul.f32 %v824, %v884
      %v901 = vmul.f32 %v826, %v885
      %v902 = vmul.f32 %v828, %v886
      %v903 = vmul.f32 %v830, %v887
      %v904 = vmul.f32 %v832, %v888
      %v905 = vmul.f32 %v834, %v889
      %v906 = vmul.f32 %v836, %v890
      %v907 = vmul.f32 %v838, %v891
      %v908 = vmul.f32 %v840, %v892
      %v909 = vmul.f32 %v842, %v893
      %v910 = vmul.f32 %v844, %v894
      %v911 = vmul.f32 %v846, %v895
      %v912 = vmul.f32 %v848, %v896
      %913 = vmatprep.subr.mxu0 0.0
      %914 = vmatpush1.msra.mxu0 %v399
      %915 = vmatprep.subr.mxu0 0.0
      %916 = vmatpush1.msra.mxu0 %v404
      %917 = vmatprep.subr.mxu0 0.0
      %918 = vmatpush1.msra.mxu0 %v409
      %919 = vmatprep.subr.mxu0 0.0
      %920 = vmatpush1.msra.mxu0 %v414
      %921 = vmatprep.subr.mxu0 0.0
      %922 = vmatpush1.msra.mxu0 %v419
      %923 = vmatprep.subr.mxu0 0.0
      %924 = vmatpush1.msra.mxu0 %v424
      %925 = vmatprep.subr.mxu0 0.0
      %926 = vmatpush1.msra.mxu0 %v429
      %927 = vmatprep.subr.mxu0 0.0
      %928 = vmatpush1.msra.mxu0 %v434
      %929 = vmatprep.subr.mxu0 0.0
      %930 = vmatpush1.msra.mxu0 %v439
      %931 = vmatprep.subr.mxu0 0.0
      %932 = vmatpush1.msra.mxu0 %v444
      %933 = vmatprep.subr.mxu0 0.0
      %934 = vmatpush1.msra.mxu0 %v449
      %935 = vmatprep.subr.mxu0 0.0
      %936 = vmatpush1.msra.mxu0 %v454
      %937 = vmatprep.subr.mxu0 0.0
      %938 = vmatpush1.msra.mxu0 %v459
      %939 = vmatprep.subr.mxu0 0.0
      %940 = vmatpush1.msra.mxu0 %v464
      %941 = vmatprep.subr.mxu0 0.0
      %942 = vmatpush1.msra.mxu0 %v469
      %943 = vmatprep.subr.mxu0 0.0
      %944 = vmatpush1.msra.mxu0 %v474
      %945 = vmatprep.subr.mxu0 0.0
      %946 = vmatpush1.msra.mxu0 0.0
      %947 = vmatprep.subr.mxu0 0.0
      %948 = vmatpush1.msra.mxu0 0.0
      %949 = vmatprep.subr.mxu0 0.0
      %950 = vmatpush1.msra.mxu0 0.0
      %951 = vmatprep.subr.mxu0 0.0
      %952 = vmatpush1.msra.mxu0 0.0
      %953 = vmatprep.subr.mxu0 0.0
      %954 = vmatpush1.msra.mxu0 0.0
      %955 = vmatprep.subr.mxu0 0.0
      %956 = vmatpush1.msra.mxu0 0.0
      %957 = vmatprep.subr.mxu0 0.0
      %958 = vmatpush1.msra.mxu0 0.0
      %959 = vmatprep.subr.mxu0 0.0
      %960 = vmatpush1.msra.mxu0 0.0
      %961 = vmatprep.subr.mxu0 0.0
      %962 = vmatpush1.msra.mxu0 0.0
      %963 = vmatprep.subr.mxu0 0.0
      %964 = vmatpush1.msra.mxu0 0.0
      %965 = vmatprep.subr.mxu0 0.0
      %966 = vmatpush1.msra.mxu0 0.0
      %967 = vmatprep.subr.mxu0 0.0
      %968 = vmatpush1.msra.mxu0 0.0
      %969 = vmatprep.subr.mxu0 0.0
      %970 = vmatpush1.msra.mxu0 0.0
      %971 = vmatprep.subr.mxu0 0.0
      %972 = vmatpush1.msra.mxu0 0.0
      %973 = vmatprep.subr.mxu0 0.0
      %974 = vmatpush1.msra.mxu0 0.0
      %975 = vmatprep.subr.mxu0 0.0
      %976 = vmatpush1.msra.mxu0 0.0
      %977 = vmatprep.mubr.f32.mxu0 0.0
      %978 = vmatmul.mubr.f32.gmra.mrb[0].mxu0 %v897
      %v979 = vpop.f32.mrb[0].mxu0
      %v980 = vadd.f32 0.0, %v979
      %v981 = vpop.f32.mrb[0].mxu0
      %982 = vmatprep.mubr.f32.mxu0 0.0
      %983 = vmatmul.mubr.f32.gmra.mrb[0].mxu0 %v898
      %v984 = vpop.f32.mrb[0].mxu0
      %v985 = vadd.f32 0.0, %v984
      %v986 = vpop.f32.mrb[0].mxu0
      %987 = vmatprep.mubr.f32.mxu0 0.0
      %988 = vmatmul.mubr.f32.gmra.mrb[0].mxu0 %v899
      %v989 = vpop.f32.mrb[0].mxu0
      %v990 = vadd.f32 0.0, %v989
      %v991 = vpop.f32.mrb[0].mxu0
      %992 = vmatprep.mubr.f32.mxu0 0.0
      %993 = vmatmul.mubr.f32.gmra.mrb[0].mxu0 %v900
      %v994 = vpop.f32.mrb[0].mxu0
      %v995 = vadd.f32 0.0, %v994
      %v996 = vpop.f32.mrb[0].mxu0
      %997 = vmatprep.mubr.f32.mxu0 0.0
      %998 = vmatmul.mubr.f32.gmra.mrb[0].mxu0 %v901
      %v999 = vpop.f32.mrb[0].mxu0
      %v1000 = vadd.f32 0.0, %v999
      %v1001 = vpop.f32.mrb[0].mxu0
      %1002 = vmatprep.mubr.f32.mxu0 0.0
      %1003 = vmatmul.mubr.f32.gmra.mrb[0].mxu0 %v902
      %v1004 = vpop.f32.mrb[0].mxu0
      %v1005 = vadd.f32 0.0, %v1004
      %v1006 = vpop.f32.mrb[0].mxu0
      %1007 = vmatprep.mubr.f32.mxu0 0.0
      %1008 = vmatmul.mubr.f32.gmra.mrb[0].mxu0 %v903
      %v1009 = vpop.f32.mrb[0].mxu0
      %v1010 = vadd.f32 0.0, %v1009
      %v1011 = vpop.f32.mrb[0].mxu0
      %1012 = vmatprep.mubr.f32.mxu0 0.0
      %1013 = vmatmul.mubr.f32.gmra.mrb[0].mxu0 %v904
      %v1014 = vpop.f32.mrb[0].mxu0
      %v1015 = vadd.f32 0.0, %v1014
      %v1016 = vpop.f32.mrb[0].mxu0
      %1017 = vmatprep.mubr.f32.mxu0 0.0
      %1018 = vmatmul.mubr.f32.gmra.mrb[0].mxu0 %v905
      %v1019 = vpop.f32.mrb[0].mxu0
      %v1020 = vadd.f32 0.0, %v1019
      %v1021 = vpop.f32.mrb[0].mxu0
      %1022 = vmatprep.mubr.f32.mxu0 0.0
      %1023 = vmatmul.mubr.f32.gmra.mrb[0].mxu0 %v906
      %v1024 = vpop.f32.mrb[0].mxu0
      %v1025 = vadd.f32 0.0, %v1024
      %v1026 = vpop.f32.mrb[0].mxu0
      %1027 = vmatprep.mubr.f32.mxu0 0.0
      %1028 = vmatmul.mubr.f32.gmra.mrb[0].mxu0 %v907
      %v1029 = vpop.f32.mrb[0].mxu0
      %v1030 = vadd.f32 0.0, %v1029
      %v1031 = vpop.f32.mrb[0].mxu0
      %1032 = vmatprep.mubr.f32.mxu0 0.0
      %1033 = vmatmul.mubr.f32.gmra.mrb[0].mxu0 %v908
      %v1034 = vpop.f32.mrb[0].mxu0
      %v1035 = vadd.f32 0.0, %v1034
      %v1036 = vpop.f32.mrb[0].mxu0
      %1037 = vmatprep.mubr.f32.mxu0 0.0
      %1038 = vmatmul.mubr.f32.gmra.mrb[0].mxu0 %v909
      %v1039 = vpop.f32.mrb[0].mxu0
      %v1040 = vadd.f32 0.0, %v1039
      %v1041 = vpop.f32.mrb[0].mxu0
      %1042 = vmatprep.mubr.f32.mxu0 0.0
      %1043 = vmatmul.mubr.f32.gmra.mrb[0].mxu0 %v910
      %v1044 = vpop.f32.mrb[0].mxu0
      %v1045 = vadd.f32 0.0, %v1044
      %v1046 = vpop.f32.mrb[0].mxu0
      %1047 = vmatprep.mubr.f32.mxu0 0.0
      %1048 = vmatmul.mubr.f32.gmra.mrb[0].mxu0 %v911
      %v1049 = vpop.f32.mrb[0].mxu0
      %v1050 = vadd.f32 0.0, %v1049
      %v1051 = vpop.f32.mrb[0].mxu0
      %1052 = vmatprep.mubr.f32.mxu0 0.0
      %1053 = vmatmul.mubr.f32.gmra.mrb[0].mxu0 %v912
      %v1054 = vpop.f32.mrb[0].mxu0
      %v1055 = vadd.f32 0.0, %v1054
      %v1056 = vpop.f32.mrb[0].mxu0
      %1057 = vdwg.mxu0
      %vm1058 = vcmp.gt.f32.partialorder %v980, 0.0
      %vm1059 = vcmp.gt.f32.partialorder %v985, 0.0
      %vm1060 = vcmp.gt.f32.partialorder %v990, 0.0
      %vm1061 = vcmp.gt.f32.partialorder %v995, 0.0
      %vm1062 = vcmp.gt.f32.partialorder %v1000, 0.0
      %vm1063 = vcmp.gt.f32.partialorder %v1005, 0.0
      %vm1064 = vcmp.gt.f32.partialorder %v1010, 0.0
      %vm1065 = vcmp.gt.f32.partialorder %v1015, 0.0
      %vm1066 = vcmp.gt.f32.partialorder %v1020, 0.0
      %vm1067 = vcmp.gt.f32.partialorder %v1025, 0.0
      %vm1068 = vcmp.gt.f32.partialorder %v1030, 0.0
      %vm1069 = vcmp.gt.f32.partialorder %v1035, 0.0
      %vm1070 = vcmp.gt.f32.partialorder %v1040, 0.0
      %vm1071 = vcmp.gt.f32.partialorder %v1045, 0.0
      %vm1072 = vcmp.gt.f32.partialorder %v1050, 0.0
      %vm1073 = vcmp.gt.f32.partialorder %v1055, 0.0
      %v1074 = vmin.f32 %v980, 0.0
      %v1075 = vmin.f32 %v985, 0.0
      %v1076 = vmin.f32 %v990, 0.0
      %v1077 = vmin.f32 %v995, 0.0
      %v1078 = vmin.f32 %v1000, 0.0
      %v1079 = vmin.f32 %v1005, 0.0
      %v1080 = vmin.f32 %v1010, 0.0
      %v1081 = vmin.f32 %v1015, 0.0
      %v1082 = vmin.f32 %v1020, 0.0
      %v1083 = vmin.f32 %v1025, 0.0
      %v1084 = vmin.f32 %v1030, 0.0
      %v1085 = vmin.f32 %v1035, 0.0
      %v1086 = vmin.f32 %v1040, 0.0
      %v1087 = vmin.f32 %v1045, 0.0
      %v1088 = vmin.f32 %v1050, 0.0
      %v1089 = vmin.f32 %v1055, 0.0
      %v1090 = vmul.f32 %v1074, 1.442695
      %v1091 = vpow.pop %v1090
      %v1092 = vmul.f32 %v1075, 1.442695
      %v1093 = vpow.pop %v1092
      %v1094 = vmul.f32 %v1076, 1.442695
      %v1095 = vpow.pop %v1094
      %v1096 = vmul.f32 %v1077, 1.442695
      %v1097 = vpow.pop %v1096
      %v1098 = vmul.f32 %v1078, 1.442695
      %v1099 = vpow.pop %v1098
      %v1100 = vmul.f32 %v1079, 1.442695
      %v1101 = vpow.pop %v1100
      %v1102 = vmul.f32 %v1080, 1.442695
      %v1103 = vpow.pop %v1102
      %v1104 = vmul.f32 %v1081, 1.442695
      %v1105 = vpow.pop %v1104
      %v1106 = vmul.f32 %v1082, 1.442695
      %v1107 = vpow.pop %v1106
      %v1108 = vmul.f32 %v1083, 1.442695
      %v1109 = vpow.pop %v1108
      %v1110 = vmul.f32 %v1084, 1.442695
      %v1111 = vpow.pop %v1110
      %v1112 = vmul.f32 %v1085, 1.442695
      %v1113 = vpow.pop %v1112
      %v1114 = vmul.f32 %v1086, 1.442695
      %v1115 = vpow.pop %v1114
      %v1116 = vmul.f32 %v1087, 1.442695
      %v1117 = vpow.pop %v1116
      %v1118 = vmul.f32 %v1088, 1.442695
      %v1119 = vpow.pop %v1118
      %v1120 = vmul.f32 %v1089, 1.442695
      %v1121 = vpow.pop %v1120
      %v1122 = vsub.f32 %v1091, 1.0
      %v1123 = vsub.f32 %v1093, 1.0
      %v1124 = vsub.f32 %v1095, 1.0
      %v1125 = vsub.f32 %v1097, 1.0
      %v1126 = vsub.f32 %v1099, 1.0
      %v1127 = vsub.f32 %v1101, 1.0
      %v1128 = vsub.f32 %v1103, 1.0
      %v1129 = vsub.f32 %v1105, 1.0
      %v1130 = vsub.f32 %v1107, 1.0
      %v1131 = vsub.f32 %v1109, 1.0
      %v1132 = vsub.f32 %v1111, 1.0
      %v1133 = vsub.f32 %v1113, 1.0
      %v1134 = vsub.f32 %v1115, 1.0
      %v1135 = vsub.f32 %v1117, 1.0
      %v1136 = vsub.f32 %v1119, 1.0
      %v1137 = vsub.f32 %v1121, 1.0
      %v1138 = vsel %vm1058, %v980, %v1122
      %v1139 = vsel %vm1059, %v985, %v1123
      %v1140 = vsel %vm1060, %v990, %v1124
      %v1141 = vsel %vm1061, %v995, %v1125
      %v1142 = vsel %vm1062, %v1000, %v1126
      %v1143 = vsel %vm1063, %v1005, %v1127
      %v1144 = vsel %vm1064, %v1010, %v1128
      %v1145 = vsel %vm1065, %v1015, %v1129
      %v1146 = vsel %vm1066, %v1020, %v1130
      %v1147 = vsel %vm1067, %v1025, %v1131
      %v1148 = vsel %vm1068, %v1030, %v1132
      %v1149 = vsel %vm1069, %v1035, %v1133
      %v1150 = vsel %vm1070, %v1040, %v1134
      %v1151 = vsel %vm1071, %v1045, %v1135
      %v1152 = vsel %vm1072, %v1050, %v1136
      %v1153 = vsel %vm1073, %v1055, %v1137
      %1154 = vst.msk [vmem:[%s244] sm:$0xff] %vm499, %v1138
      %1155 = vst.msk [vmem:[%s244 + $0x8] sm:$0xff] %vm499, %v1139
      %1156 = vst.msk [vmem:[%s244 + $0x10] sm:$0xff] %vm499, %v1140
      %1157 = vst.msk [vmem:[%s244 + $0x18] sm:$0xff] %vm499, %v1141
      %1158 = vst.msk [vmem:[%s244 + $0x20] sm:$0xff] %vm499, %v1142
      %1159 = vst.msk [vmem:[%s244 + $0x28] sm:$0xff] %vm499, %v1143
      %1160 = vst.msk [vmem:[%s244 + $0x30] sm:$0xff] %vm499, %v1144
      %1161 = vst.msk [vmem:[%s244 + $0x38] sm:$0xff] %vm499, %v1145
      %1162 = vst.msk [vmem:[%s244 + $0x40] sm:$0xff] %vm499, %v1146
      %1163 = vst.msk [vmem:[%s244 + $0x48] sm:$0xff] %vm499, %v1147
      %1164 = vst.msk [vmem:[%s244 + $0x50] sm:$0xff] %vm499, %v1148
      %1165 = vst.msk [vmem:[%s244 + $0x58] sm:$0xff] %vm499, %v1149
      %1166 = vst.msk [vmem:[%s244 + $0x60] sm:$0xff] %vm499, %v1150
      %1167 = vst.msk [vmem:[%s244 + $0x68] sm:$0xff] %vm499, %v1151
      %1168 = vst.msk [vmem:[%s244 + $0x70] sm:$0xff] %vm499, %v1152
      %1169 = vst.msk [vmem:[%s244 + $0x78] sm:$0xff] %vm499, %v1153
      %p1170 = scmp.lt.s32.totalorder %s16, 1
      %s1171 = scalar_select %p1170, %s16, 1
      %s1172 = smul.addr %s1171, 16
      %s1173 = smul.addr %s1172, 8
      %s1174 = scalar_lea.vmem %s5, %s1173
      // Predicated region
      $region41: #{tpu_custom_call.1} parent=39 // pred_check
        %p1175 = pneg %p149
      $region42: #{tpu_custom_call.1} parent=39 // pred_check_branch
        %1177 = sbr.rel (%p1175) target = $region44
      $region43: #{tpu_custom_call.1} parent=39 // pred_region
        _
      $region44: #{tpu_custom_call.1} parent=39 // pred_fallthru
        _
    $region40: #{tpu_custom_call.1} parent=5 // pred_fallthru
      _
    %p1178 = scmp.le.s32.totalorder 2, %s11
    // Predicated region
    $region45: #{tpu_custom_call.1} parent=5 // pred_check
      %p1179 = pneg %p1178
    $region46: #{tpu_custom_call.1} parent=5 // pred_check_branch
      %1181 = sbr.rel (%p1179) target = $region48
    $region47: #{tpu_custom_call.1} parent=5 // pred_region
      %s1182 = ssub.s32 %s11, 2
      // Predicated region
      $region49: #{tpu_custom_call.1} parent=47 // pred_check
        %p1183 = pneg %p155
      $region50: #{tpu_custom_call.1} parent=47 // pred_check_branch
        %1185 = sbr.rel (%p1183) target = $region52
      $region51: #{tpu_custom_call.1} parent=47 // pred_region
        %p1186 = scmp.lt.s32.totalorder %s17, 1
        %s1187 = scalar_select %p1186, %s17, 1
        %s1188 = smul.addr %s1187, 16
        %s1189 = smul.addr %s1188, 8
        %s1190 = scalar_lea.vmem %s5, %s1189
      $region52: #{tpu_custom_call.1} parent=47 // pred_fallthru
        _
    $region48: #{tpu_custom_call.1} parent=5 // pred_fallthru
      _
  $region6: #{tpu_custom_call.1} parent=0 // loop_footer
    %s15 = sadd.s32 1, %s11
  $region7: #{tpu_custom_call.1} parent=0 // loop_footer_branch
    %10 = sbr.rel target = $region3
  $region8: #{tpu_custom_call.1} parent=0 // loop_exit
    _

</llo_original>
